<compile_context>
chip_gen: v7x
topology: tpu7x:2x2x1
jax: 0.10.0
libtpu: 0.0.40
codegen_flags: <defaults>
</compile_context>

<pallas_src>
import jax
import jax.numpy as jnp
from jax.experimental import pallas as pl
from jax.experimental.pallas import tpu as pltpu


def _pos_enc_kernel(x_ref, pe_ref, o_ref):
    # x_ref / o_ref: (block_b, block_s, D); pe_ref: (1, block_s, D).
    # Broadcast add over the batch-block. Pure VPU; HBM-bound.
    o_ref[...] = (x_ref[...] + pe_ref[...]).astype(o_ref.dtype)


def _round_up(x, m):
    return -(-x // m) * m


def _sublane_for(itemsize):
    # Sub-32-bit dtypes pack rows along sublanes.
    if itemsize >= 4:
        return 8
    if itemsize == 2:
        return 16
    return 32


def _pick_tiles(B, S, D, itemsize,
                per_tile_target=4 << 20,   # ~4 MiB per (block_s, D) PE tile
                total_budget=28 << 20):    # double-buffered cap, v7x-safe
    """Pick (block_b, block_s, footprint_bytes)."""
    sublane = _sublane_for(itemsize)
    s_ceil = _round_up(S, sublane)
    row_bytes = D * itemsize

    # block_s: largest sublane-multiple divisor of s_ceil whose (block_s, D)
    # tile fits per_tile_target (divisor => no padded trailing seq tile).
    n_units = s_ceil // sublane
    block_s = sublane
    for k in range(1, n_units + 1):
        if n_units % k == 0:
            cand = k * sublane
            if cand * row_bytes <= per_tile_target:
                block_s = max(block_s, cand)
    # TODO(synk): if D is so wide that even one sublane-row tile exceeds the
    # budget, add D-tiling; not needed for practical d_model widths.

    tile = block_s * row_bytes

    def footprint(bb):
        # double-buffered x + pe + out tiles
        return 2 * tile * (2 * bb + 1)

    # block_b: largest divisor of B whose footprint fits the budget.
    block_b = 1
    for bb in range(1, B + 1):
        if B % bb == 0 and footprint(bb) <= total_budget:
            block_b = bb

    return block_b, block_s, footprint(block_b)


def positional_encoder_learnable(x, weight, *, block_s=None, block_b=None,
                                 in_place=False):
    """x: (B, S, D); weight: (1, max_len, D) with max_len >= S."""
    B, S, D = x.shape
    _, max_len, Dw = weight.shape
    assert Dw == D and max_len >= S

    # PyTorch convention: the learned table lives in the activation dtype.
    # Avoids silently promoting the output (and doubling HBM write bytes).
    if weight.dtype != x.dtype:
        weight = weight.astype(x.dtype)
    out_dtype = x.dtype
    itemsize = jnp.dtype(out_dtype).itemsize

    auto_b, auto_s, _ = _pick_tiles(B, S, D, itemsize)
    if block_s is None:
        block_s = auto_s
    if block_b is None:
        block_b = auto_b

    tile = block_s * D * itemsize
    footprint = 2 * tile * (2 * block_b + 1)
    # Explicit scoped-VMEM limit: actual footprint + ~25% headroom, floored so
    # compiler-internal scratch fits, capped v7x-safe (64 MiB physical per TC).
    vmem_limit = min(max(int(footprint * 1.25) + (1 << 20), 8 << 20), 48 << 20)

    num_s = pl.cdiv(S, block_s)
    num_b = pl.cdiv(B, block_b)

    # TODO(synk): if d_model is not a multiple of 128, reshape/pad wrapper-side
    # to present a lane-dense last dim to out_specs (avoids masked vst stores).

    return pl.pallas_call(
        _pos_enc_kernel,
        out_shape=jax.ShapeDtypeStruct((B, S, D), out_dtype),
        grid_spec=pltpu.PrefetchScalarGridSpec(
            num_scalar_prefetch=0,
            # batch innermost (fastest) -> PE tile stays resident across it
            grid=(num_s, num_b),
            in_specs=[
                # x tile: (block_b, block_s, D) at (batch-block b, seq-block s)
                pl.BlockSpec((block_b, block_s, D), lambda s, b: (b, s, 0)),
                # PE tile: same seq-block of the full weight table, shared
                # across b (block index independent of b -> no re-DMA)
                pl.BlockSpec((1, block_s, D), lambda s, b: (0, s, 0)),
            ],
            out_specs=pl.BlockSpec((block_b, block_s, D), lambda s, b: (b, s, 0)),
        ),
        input_output_aliases=({0: 0} if in_place else {}),
        compiler_params=pltpu.CompilerParams(
            # seq "parallel": v7x megacore shards the seq axis (keeps per-TC PE
            # residency); batch "arbitrary" = plain sequential loop, free on
            # single-TC v5e/v6e.
            dimension_semantics=("parallel", "arbitrary"),
            vmem_limit_bytes=vmem_limit,
        ),
    )(x, weight)


if __name__ == "__main__":
    B, S, D = 2, 64, 128     # batch, seq, d_model (small but tiling-exercising)
    MAX_LEN = 128            # max_len >= S

    key = jax.random.PRNGKey(0)
    kx, kw = jax.random.split(key)

    x = jax.random.normal(kx, (B, S, D), dtype=jnp.float32)
    # torch.nn.init.uniform_(weight, -0.1, 0.1) equivalent, deterministic:
    weight = jax.random.uniform(
        kw, (1, MAX_LEN, D), dtype=jnp.float32, minval=-0.1, maxval=0.1
    )

    ref = x + weight[:, :S, :]

    # 1) Forced small tiles: grid = (2, 2); exercises multi-block seq path,
    #    per-batch blocks, and PE-tile residency across the batch axis.
    out_tiled = positional_encoder_learnable(x, weight, block_s=32, block_b=1)
    out_tiled = jax.block_until_ready(out_tiled)
    assert out_tiled.shape == (B, S, D)
    assert jnp.allclose(out_tiled, ref, atol=1e-6), "mismatch (tiled) vs reference"

    # 2) Auto tile path: batch-blocked (block_b=2), single seq block here.
    out_auto = positional_encoder_learnable(x, weight)
    out_auto = jax.block_until_ready(out_auto)
    assert jnp.allclose(out_auto, ref, atol=1e-6), "mismatch (auto) vs reference"

    # 3) In-place (aliased) path: donate a fresh copy of x so the output reuses
    #    its HBM buffer.
    x_copy = x + 0.0
    aliased_fn = jax.jit(
        lambda xx, ww: positional_encoder_learnable(xx, ww, in_place=True),
        donate_argnums=(0,),
    )
    out_alias = aliased_fn(x_copy, weight)
    out_alias = jax.block_until_ready(out_alias)
    assert jnp.allclose(out_alias, ref, atol=1e-6), "mismatch (aliased) vs reference"

    print("KERNEL_OK")
</pallas_src>

<mosaic_0001>
module attributes {stable_mosaic.version = 11 : i64} {
  func.func @_pos_enc_kernel(%arg0: i32, %arg1: i32, %arg2: memref<1x32x128xf32, #tpu.memory_space<vmem>>, %arg3: memref<1x32x128xf32, #tpu.memory_space<vmem>>, %arg4: memref<1x32x128xf32, #tpu.memory_space<vmem>>) attributes {dimension_semantics = [#tpu.dimension_semantics<parallel>, #tpu.dimension_semantics<arbitrary>], iteration_bounds = array<i64: 2, 2>, scalar_prefetch = 0 : i64, scratch_operands = 0 : i64, tpu.core_type = #tpu.core_type<tc>, window_params = [{transform_indices = @transform_0, window_bounds = array<i64: 1, 32, 128>}, {transform_indices = @transform_1, window_bounds = array<i64: 1, 32, 128>}, {transform_indices = @transform_2, window_bounds = array<i64: 1, 32, 128>}]} {
    %c0 = arith.constant 0 : index
    %c0_0 = arith.constant 0 : index
    %c0_1 = arith.constant 0 : index
    %0 = vector.load %arg2[%c0, %c0_0, %c0_1] : memref<1x32x128xf32, #tpu.memory_space<vmem>>, vector<1x32x128xf32>
    %c0_2 = arith.constant 0 : index
    %c0_3 = arith.constant 0 : index
    %c0_4 = arith.constant 0 : index
    %1 = vector.load %arg3[%c0_2, %c0_3, %c0_4] : memref<1x32x128xf32, #tpu.memory_space<vmem>>, vector<1x32x128xf32>
    %2 = arith.addf %0, %1 : vector<1x32x128xf32>
    %c0_5 = arith.constant 0 : index
    %c0_6 = arith.constant 0 : index
    %c0_7 = arith.constant 0 : index
    %3 = vector.load %arg4[%c0_5, %c0_6, %c0_7] : memref<1x32x128xf32, #tpu.memory_space<vmem>>, vector<1x32x128xf32>
    tpu.vector_store %arg4[%c0_5, %c0_6, %c0_7], %2 {strides = array<i32>} : memref<1x32x128xf32, #tpu.memory_space<vmem>>, vector<1x32x128xf32>,
    return
  }
  func.func @transform_0(%arg0: i32, %arg1: i32) -> (i32, i32, i32) {
    %c0_i32 = arith.constant 0 : i32
    %c0_i32_0 = arith.constant 0 : i32
    return %arg1, %arg0, %c0_i32 : i32, i32, i32
  }
  func.func @transform_1(%arg0: i32, %arg1: i32) -> (i32, i32, i32) {
    %c0_i32 = arith.constant 0 : i32
    %c0_i32_0 = arith.constant 0 : i32
    %c0_i32_1 = arith.constant 0 : i32
    return %c0_i32, %arg0, %c0_i32_0 : i32, i32, i32
  }
  func.func @transform_2(%arg0: i32, %arg1: i32) -> (i32, i32, i32) {
    %c0_i32 = arith.constant 0 : i32
    %c0_i32_0 = arith.constant 0 : i32
    return %arg1, %arg0, %c0_i32 : i32, i32, i32
  }
}

</mosaic_0001>

<llo_original>
// kernel: tpu_custom_call.1
$region0: #{tpu_custom_call.1}
  #allocation0 [shape = 'u32[]', space=smem, size = 0x4, offset = 0x4, fixed_abs, tag = 'smem constant byte address 0x4 - core index']
  #allocation1 [shape = 'u32[144,128]{1,0:T(1,128)}', space=vmem, size = 0x12000, scoped, tag = 'internal scratch']
  %s0 = inlined_call_operand.hbm [shape: f32[2,64,128], index: 0, kind: input, shape index: {}]
  %s1 = inlined_call_operand.hbm [shape: f32[1,128,128], index: 1, kind: input, shape index: {}]
  %s2 = inlined_call_operand.hbm [shape: f32[2,64,128], index: 2, kind: output, shape index: {}]
  %s3 = sld [smem:[#allocation0]]
  $region49: #{tpu_custom_call.1} parent=0
    _
  %s5 = ssub.s32 1, %s3
  %s6 = scalar_select 0, %s5, %s3
  $region1: #{tpu_custom_call.1} parent=0
    #allocation2 [shape = 'u8[32768]{0}', space=vmem, size = 0x8000, scoped, tag = 'input window, operand 0']
    #allocation3 [shape = 's32[2]{0}', space=sflag, size = 0x8, scoped, tag = 'scoped memory for tpu_custom_call.1']
    #allocation4 [shape = 's32[2]{0}', space=sflag, size = 0x8, scoped, tag = 'scoped memory for tpu_custom_call.1']
    #allocation5 [shape = 'u8[32768]{0}', space=vmem, size = 0x8000, scoped, tag = 'input window, operand 1']
    #allocation6 [shape = 's32[2]{0}', space=sflag, size = 0x8, scoped, tag = 'scoped memory for tpu_custom_call.1']
    #allocation7 [shape = 'u8[32768]{0}', space=vmem, size = 0x8000, scoped, tag = 'output window, operand 0']
    %7 = vsyncpa [#allocation3], 0
    %s8 = scalar_lea.sflag [#allocation3], 1
    %9 = vsyncpa %s8, 0
    %10 = vsyncpa [#allocation6], 0
    %s11 = scalar_lea.sflag [#allocation6], 1
    %12 = vsyncpa %s11, 0
    %13 = vsyncpa [#allocation4], 0
    %s14 = scalar_lea.sflag [#allocation4], 1
    %15 = vsyncpa %s14, 0
    loop: start=0, step=1, limit=6
    $region2: #{tpu_custom_call.1} parent=1 // loop_pre_header
      _
    $region3: #{tpu_custom_call.1} parent=1 // loop_header
      %s17 = sphi 0, %s21
      %p18 = scmp.ge.s32.totalorder %s17, 6
      %s24 = sphi 0, %s36
      %s25 = sphi 0, %s32
      %s26 = sphi 0, %s24
      %s27 = sphi 0, %s25
      %s28 = sphi 0, %s26
      %s29 = sphi 0, %s27
      %s41 = sphi 0, %s43
      %s44 = sphi 0, %s41
      %s45 = sphi 0, %s44
      %s61 = sphi 0, %s45
      %s67 = sphi 0, %s69
      %s70 = sphi 0, %s67
      %s71 = sphi 0, %s70
      %s87 = sphi 0, %s71
      %s95 = sphi 0, %s97
      %s98 = sphi 0, %s95
      %s99 = sphi 0, %s98
      %s115 = sphi 0, %s99
    $region4: #{tpu_custom_call.1} parent=1 // loop_header_branch
      %20 = sbr.rel (%p18) target = $region8
    $region5: #{tpu_custom_call.1} parent=1 // loop_body
      %s22 = ssub.s32 %s17, 1
      %s23 = ssub.s32 %s17, 2
      %s30 = sadd.s32 1, %s25
      %p31 = scmp.ge.s32.totalorder %s30, 2
      %s32 = scalar_select %p31, 0, %s30
      %s33 = sadd.s32 1, %s24
      %s34 = scalar_select %p31, %s33, %s24
      %p35 = scmp.ge.s32.totalorder %s34, 2
      %s36 = scalar_select %p35, 0, %s34
      %s37 = ssub.s32 %s25, %s32
      %s38 = ssub.s32 %s24, %s36
      %s39 = sor.u32 %s37, %s38
      %p40 = scmp.eq.s32.totalorder %s39, 0
      %s42 = sadd.s32 %s41, 1
      %s43 = scalar_select %p40, %s41, %s42
      %p46 = pneg %p40
      %p47 = scmp.eq.s32.totalorder %s17, 3
      %p48 = por %p46, %p47
      %p49 = scmp.ne.s32.totalorder %s41, %s44
      %p50 = scmp.eq.s32.totalorder %s17, 0
      %p51 = por %p49, %p50
      %p52 = scmp.ne.s32.totalorder %s41, %s44
      %p53 = scmp.eq.s32.totalorder %s22, 3
      %p54 = por %p52, %p53
      %p55 = scmp.ne.s32.totalorder %s44, %s45
      %p56 = scmp.eq.s32.totalorder %s22, 0
      %p57 = por %p55, %p56
      %p58 = scmp.ne.s32.totalorder %s44, %s45
      %p59 = scmp.eq.s32.totalorder %s23, 3
      %p60 = por %p58, %p59
      %p62 = scmp.ne.s32.totalorder %s45, %s61
      %p63 = scmp.eq.s32.totalorder %s23, 0
      %p64 = por %p62, %p63
      %s65 = ssub.s32 %s24, %s36
      %p66 = scmp.eq.s32.totalorder %s65, 0
      %s68 = sadd.s32 %s67, 1
      %s69 = scalar_select %p66, %s67, %s68
      %p72 = pneg %p66
      %p73 = scmp.eq.s32.totalorder %s17, 3
      %p74 = por %p72, %p73
      %p75 = scmp.ne.s32.totalorder %s67, %s70
      %p76 = scmp.eq.s32.totalorder %s17, 0
      %p77 = por %p75, %p76
      %p78 = scmp.ne.s32.totalorder %s67, %s70
      %p79 = scmp.eq.s32.totalorder %s22, 3
      %p80 = por %p78, %p79
      %p81 = scmp.ne.s32.totalorder %s70, %s71
      %p82 = scmp.eq.s32.totalorder %s22, 0
      %p83 = por %p81, %p82
      %p84 = scmp.ne.s32.totalorder %s70, %s71
      %p85 = scmp.eq.s32.totalorder %s23, 3
      %p86 = por %p84, %p85
      %p88 = scmp.ne.s32.totalorder %s71, %s87
      %p89 = scmp.eq.s32.totalorder %s23, 0
      %p90 = por %p88, %p89
      %s91 = ssub.s32 %s25, %s32
      %s92 = ssub.s32 %s24, %s36
      %s93 = sor.u32 %s91, %s92
      %p94 = scmp.eq.s32.totalorder %s93, 0
      %s96 = sadd.s32 %s95, 1
      %s97 = scalar_select %p94, %s95, %s96
      %p100 = pneg %p94
      %p101 = scmp.eq.s32.totalorder %s17, 3
      %p102 = por %p100, %p101
      %p103 = scmp.ne.s32.totalorder %s95, %s98
      %p104 = scmp.eq.s32.totalorder %s17, 0
      %p105 = por %p103, %p104
      %p106 = scmp.ne.s32.totalorder %s95, %s98
      %p107 = scmp.eq.s32.totalorder %s22, 3
      %p108 = por %p106, %p107
      %p109 = scmp.ne.s32.totalorder %s98, %s99
      %p110 = scmp.eq.s32.totalorder %s22, 0
      %p111 = por %p109, %p110
      %p112 = scmp.ne.s32.totalorder %s98, %s99
      %p113 = scmp.eq.s32.totalorder %s23, 3
      %p114 = por %p112, %p113
      %p116 = scmp.ne.s32.totalorder %s99, %s115
      %p117 = scmp.eq.s32.totalorder %s23, 0
      %p118 = por %p116, %p117
      %p119 = scmp.le.s32.totalorder 1, %s17
      %p120 = scmp.lt.s32.totalorder %s17, 5
      %p121 = pnand %p119, %p120
      %p122 = pneg %p121
      // Predicated region
      $region9: #{tpu_custom_call.1} parent=5 // pred_check
        _
      $region10: #{tpu_custom_call.1} parent=5 // pred_check_branch
        %124 = sbr.rel (%p121) target = $region12
      $region11: #{tpu_custom_call.1} parent=5 // pred_region
        %s125 = ssub.s32 %s17, 1
      $region12: #{tpu_custom_call.1} parent=5 // pred_fallthru
        _
      %p126 = scmp.lt.s32.totalorder %s17, 4
      // Predicated region
      $region13: #{tpu_custom_call.1} parent=5 // pred_check
        %p127 = pneg %p126
      $region14: #{tpu_custom_call.1} parent=5 // pred_check_branch
        %129 = sbr.rel (%p127) target = $region16
      $region15: #{tpu_custom_call.1} parent=5 // pred_region
        // Predicated region
        $region17: #{tpu_custom_call.1} parent=15 // pred_check
          %p130 = pneg %p51
        $region18: #{tpu_custom_call.1} parent=15 // pred_check_branch
          %132 = sbr.rel (%p130) target = $region20
        $region19: #{tpu_custom_call.1} parent=15 // pred_region
          %s133 = sand.u32 %s41, 1
          %s134 = scalar_lea.sflag [#allocation3], %s133
          %s135 = sand.u32 %s41, 1
          %s136 = smul.addr %s135, 32
          %s137 = scalar_lea.vmem [#allocation2], %s136
          %s138 = smul.u32 4, %s24
          %s140 = ssub.s32 512, 512
          %141 = vsyncadd %s134, %s140
          %s142 = smul.addr %s25, 8
          %s143 = sadd.s32 %s138, %s142
          %s144 = smul.addr %s143, 128
          %s145 = scalar_lea.hbm %s0, %s144
          %s146 = sshll.u32 %s137, 4
          %s147 = int_to_ptr.vmem [resolvable:$true] %s146
          %152 = dma.hbm_to_vmem [thread:$0]  %s145, 512, %s147, %s134, 128, 128, 8
        $region20: #{tpu_custom_call.1} parent=15 // pred_fallthru
          _
        // Predicated region
        $region21: #{tpu_custom_call.1} parent=15 // pred_check
          %p153 = pneg %p77
        $region22: #{tpu_custom_call.1} parent=15 // pred_check_branch
          %155 = sbr.rel (%p153) target = $region24
        $region23: #{tpu_custom_call.1} parent=15 // pred_region
          %s156 = sand.u32 %s67, 1
          %s157 = scalar_lea.sflag [#allocation6], %s156
          %s158 = sand.u32 %s67, 1
          %s159 = smul.addr %s158, 32
          %s160 = scalar_lea.vmem [#allocation5], %s159
          %s161 = smul.u32 4, %s24
          %s163 = ssub.s32 512, 512
          %164 = vsyncadd %s157, %s163
          %s165 = smul.addr %s161, 128
          %s166 = scalar_lea.hbm %s1, %s165
          %s167 = sshll.u32 %s160, 4
          %s168 = int_to_ptr.vmem [resolvable:$true] %s167
          %173 = dma.hbm_to_vmem [thread:$0]  %s166, 512, %s168, %s157, 128, 128, 8
        $region24: #{tpu_custom_call.1} parent=15 // pred_fallthru
          _
      $region16: #{tpu_custom_call.1} parent=5 // pred_fallthru
        _
      %p174 = scmp.le.s32.totalorder 1, %s17
      %p175 = scmp.lt.s32.totalorder %s17, 5
      %p176 = pnand %p174, %p175
      %p177 = pneg %p176
      // Predicated region
      $region25: #{tpu_custom_call.1} parent=5 // pred_check
        _
      $region26: #{tpu_custom_call.1} parent=5 // pred_check_branch
        %179 = sbr.rel (%p176) target = $region28
      $region27: #{tpu_custom_call.1} parent=5 // pred_region
        %s180 = ssub.s32 %s17, 1
        %s181 = sand.u32 %s44, 1
        %s182 = scalar_lea.sflag [#allocation3], %s181
        %s183 = sand.u32 %s44, 1
        %s184 = smul.addr %s183, 32
        %s185 = scalar_lea.vmem [#allocation2], %s184
        // Predicated region
        $region29: #{tpu_custom_call.1} parent=27 // pred_check
          %p186 = pneg %p57
        $region30: #{tpu_custom_call.1} parent=27 // pred_check_branch
          %188 = sbr.rel (%p186) target = $region32
        $region31: #{tpu_custom_call.1} parent=27 // pred_region
          %189 = dma.done %s182, 512
        $region32: #{tpu_custom_call.1} parent=27 // pred_fallthru
          _
        %s190 = sand.u32 %s70, 1
        %s191 = scalar_lea.sflag [#allocation6], %s190
        %s192 = sand.u32 %s70, 1
        %s193 = smul.addr %s192, 32
        %s194 = scalar_lea.vmem [#allocation5], %s193
        // Predicated region
        $region33: #{tpu_custom_call.1} parent=27 // pred_check
          %p195 = pneg %p83
        $region34: #{tpu_custom_call.1} parent=27 // pred_check_branch
          %197 = sbr.rel (%p195) target = $region36
        $region35: #{tpu_custom_call.1} parent=27 // pred_region
          %198 = dma.done %s191, 512
        $region36: #{tpu_custom_call.1} parent=27 // pred_fallthru
          _
        %s199 = sand.u32 %s44, 1
        %s200 = scalar_lea.sflag [#allocation3], %s199
        %s201 = sand.u32 %s44, 1
        %s202 = smul.addr %s201, 32
        %s203 = scalar_lea.vmem [#allocation2], %s202
        %p204 = pneg %p57
        %p205 = pneg %p54
        %s206 = sand.u32 %s70, 1
        %s207 = scalar_lea.sflag [#allocation6], %s206
        %s208 = sand.u32 %s70, 1
        %s209 = smul.addr %s208, 32
        %s210 = scalar_lea.vmem [#allocation5], %s209
        %p211 = pneg %p83
        %p212 = pneg %p80
        %p213 = pneg %p111
        %p214 = pneg %p108
        %s215 = sand.u32 %s98, 1
        %s216 = scalar_lea.sflag [#allocation4], %s215
        %s217 = sand.u32 %s98, 1
        %s218 = smul.addr %s217, 32
        %s219 = scalar_lea.vmem [#allocation7], %s218
        %s220 = smul.u32 4, %s26
        %s221 = smul.u32 4, %s26
        %s222 = smul.u32 4, %s26
        %v223 = vld [vmem:[%s185] sm:$0xff]
        %v224 = vld [vmem:[%s185 + $0x8] sm:$0xff]
        %v225 = vld [vmem:[%s185 + $0x10] sm:$0xff]
        %v226 = vld [vmem:[%s185 + $0x18] sm:$0xff]
        %v227 = vld [vmem:[%s194] sm:$0xff]
        %v228 = vld [vmem:[%s194 + $0x8] sm:$0xff]
        %v229 = vld [vmem:[%s194 + $0x10] sm:$0xff]
        %v230 = vld [vmem:[%s194 + $0x18] sm:$0xff]
        %v231 = vadd.f32 %v223, %v227
        %v232 = vadd.f32 %v224, %v228
        %v233 = vadd.f32 %v225, %v229
        %v234 = vadd.f32 %v226, %v230
        %235 = vst [vmem:[%s219] sm:$0xff] %v231
        %236 = vst [vmem:[%s219 + $0x8] sm:$0xff] %v232
        %237 = vst [vmem:[%s219 + $0x10] sm:$0xff] %v233
        %238 = vst [vmem:[%s219 + $0x18] sm:$0xff] %v234
        %s239 = sand.u32 %s98, 1
        %s240 = scalar_lea.sflag [#allocation4], %s239
        %s241 = sand.u32 %s98, 1
        %s242 = smul.addr %s241, 32
        %s243 = scalar_lea.vmem [#allocation7], %s242
        // Predicated region
        $region37: #{tpu_custom_call.1} parent=27 // pred_check
          %p244 = pneg %p108
        $region38: #{tpu_custom_call.1} parent=27 // pred_check_branch
          %246 = sbr.rel (%p244) target = $region40
        $region39: #{tpu_custom_call.1} parent=27 // pred_region
          %s247 = smul.u32 4, %s26
          %s249 = ssub.s32 512, 512
          %250 = vsyncadd %s240, %s249
          %s251 = smul.addr %s27, 8
          %s252 = sadd.s32 %s247, %s251
          %s253 = smul.addr %s252, 128
          %s254 = scalar_lea.hbm %s2, %s253
          %s255 = sshll.u32 %s243, 4
          %s256 = int_to_ptr.vmem [resolvable:$true] %s255
          %261 = dma.vmem_to_hbm [thread:$0]  %s256, 512, %s254, %s240, 128, 128, 8
        $region40: #{tpu_custom_call.1} parent=27 // pred_fallthru
          _
      $region28: #{tpu_custom_call.1} parent=5 // pred_fallthru
        _
      %p262 = scmp.le.s32.totalorder 2, %s17
      // Predicated region
      $region41: #{tpu_custom_call.1} parent=5 // pred_check
        %p263 = pneg %p262
      $region42: #{tpu_custom_call.1} parent=5 // pred_check_branch
        %265 = sbr.rel (%p263) target = $region44
      $region43: #{tpu_custom_call.1} parent=5 // pred_region
        %s266 = ssub.s32 %s17, 2
        // Predicated region
        $region45: #{tpu_custom_call.1} parent=43 // pred_check
          %p267 = pneg %p114
        $region46: #{tpu_custom_call.1} parent=43 // pred_check_branch
          %269 = sbr.rel (%p267) target = $region48
        $region47: #{tpu_custom_call.1} parent=43 // pred_region
          %s270 = sand.u32 %s99, 1
          %s271 = scalar_lea.sflag [#allocation4], %s270
          %s272 = sand.u32 %s99, 1
          %s273 = smul.addr %s272, 32
          %s274 = scalar_lea.vmem [#allocation7], %s273
          %275 = dma.done %s271, 512
        $region48: #{tpu_custom_call.1} parent=43 // pred_fallthru
          _
      $region44: #{tpu_custom_call.1} parent=5 // pred_fallthru
        _
    $region6: #{tpu_custom_call.1} parent=1 // loop_footer
      %s21 = sadd.s32 1, %s17
    $region7: #{tpu_custom_call.1} parent=1 // loop_footer_branch
      %16 = sbr.rel target = $region3
    $region8: #{tpu_custom_call.1} parent=1 // loop_exit
      _
    %276 = vsyncpa [#allocation3], 1
    %s277 = scalar_lea.sflag [#allocation3], 1
    %278 = vsyncpa %s277, 1
    %279 = vsyncpa [#allocation6], 1
    %s280 = scalar_lea.sflag [#allocation6], 1
    %281 = vsyncpa %s280, 1
    %282 = vsyncpa [#allocation4], 1
    %s283 = scalar_lea.sflag [#allocation4], 1
    %284 = vsyncpa %s283, 1

</llo_original>
